<compile_context>
chip_gen: v7x
topology: tpu7x:2x2x1
jax: 0.10.0
libtpu: 0.0.40
codegen_flags: <defaults>
</compile_context>

<pallas_src>
import functools

import jax
import jax.numpy as jnp
from jax.experimental import pallas as pl
from jax.experimental.pallas import tpu as pltpu


# ----------------------------------------------------------------------------
# exact (erf-based) GELU, in-kernel.
# erf via Abramowitz & Stegun 7.1.26 (|err| < 1.5e-7) -- built only from ops that
# are guaranteed to lower in Mosaic (exp / mul / add / where).
# ----------------------------------------------------------------------------
_INV_SQRT2 = 0.7071067811865476
_ERF_P = 0.3275911
_ERF_A = (0.254829592, -0.284496736, 1.421413741, -1.453152027, 1.061405429)


def _gelu_exact(x):
    u = x * _INV_SQRT2
    a = jnp.abs(u)
    t = 1.0 / (1.0 + _ERF_P * a)
    a1, a2, a3, a4, a5 = _ERF_A
    poly = t * (a1 + t * (a2 + t * (a3 + t * (a4 + t * a5))))
    erf_abs = 1.0 - poly * jnp.exp(-a * a)
    erf = jnp.where(u >= 0, erf_abs, -erf_abs)
    return 0.5 * x * (1.0 + erf)


# ----------------------------------------------------------------------------
# Fused kernel -- one grid step per batch element.
#   xd_ref   : (1, Hs, Wd)        parity-expanded input rows (lane-dense)
#   wcat_ref : (Wd, WsCo)         conv0 weight folded with the PixelShuffle
#   b0f_ref  : (Hs, WsCo)         conv0 bias in shuffled, lane-dense layout
#   mcat_ref : (K, WsCo, 2*WsCo)  banded KxK weights, [conv1 | conv2] along lanes
#   bg_ref   : (1, 2*WsCo)        [b1 tiled | b2 tiled]
#   o_ref    : (1, Hs, WsCo)      gated output, lane-dense
#   ybuf_ref : VMEM (Hs+2*pad, WsCo) scratch -- vertically zero-padded activation
# ----------------------------------------------------------------------------
def _fused_block_kernel(xd_ref, wcat_ref, b0f_ref, mcat_ref, bg_ref,
                        o_ref, ybuf_ref, *, Hs, WsCo, K):
    pad = K // 2

    # conv0 (1x1) + bias + PixelShuffle: one lane-dense MXU matmul.
    y = jnp.dot(xd_ref[0], wcat_ref[...],
                preferred_element_type=jnp.float32) + b0f_ref[...]

    # GELU fused in-kernel (EUP work, effectively free).
    y = _gelu_exact(y)

    # vertical "same" padding via VMEM scratch.
    ybuf_ref[...] = jnp.zeros(ybuf_ref.shape, jnp.float32)
    ybuf_ref[pad:pad + Hs, :] = y

    # gated KxK conv: K banded matmuls; conv1 and conv2 share each shifted operand
    # (packed along output lanes).  Horizontal zero-padding is encoded in the bands.
    acc = jnp.zeros((Hs, 2 * WsCo), jnp.float32)
    for ky in range(K):
        acc = acc + jnp.dot(ybuf_ref[ky:ky + Hs, :], mcat_ref[ky],
                            preferred_element_type=jnp.float32)
    acc = acc + bg_ref[...]

    out = acc[:, :WsCo] * jnp.tanh(acc[:, WsCo:])
    o_ref[0] = out.astype(o_ref.dtype)


# ----------------------------------------------------------------------------
# Wrapper: NCHW in / NCHW out (like PyTorch).
# ----------------------------------------------------------------------------
def basic_block_forward(x_nchw, params, *, upscale_factor, kernel_size):
    r, K = upscale_factor, kernel_size
    N, Ci, H, W = x_nchw.shape
    w0, b0 = params["w0"], params["b0"]          # (Ci, Co*r^2), (Co*r^2,)
    w1, b1 = params["w1"], params["b1"]          # (K, K, Co, Co), (Co,)
    w2, b2 = params["w2"], params["b2"]
    Cmid = w0.shape[1]
    Co = Cmid // (r * r)
    Hs, Ws = H * r, W * r
    Wd = r * W * Ci            # lane width of the parity-expanded input rows
    WsCo = Ws * Co             # lane width of the shuffled activation / output
    f32 = jnp.float32
    # TODO(synk): on v6e/v7x cast MXU operands to bf16 (keep f32 accumulate) once the
    # 1e-3 correctness tolerance is relaxed; kept f32 here so the self-check is robust.

    # ------------- wrapper-side layout / weight plumbing (tiny, one-off) ---------
    # Parity-expanded input: xd[n, h*r+i, i*W*Ci : (i+1)*W*Ci] = x[n, h, :, :]
    x = jnp.transpose(x_nchw, (0, 2, 3, 1)).astype(f32).reshape(N, H, W * Ci)
    eye_r = jnp.eye(r, dtype=f32)
    xd = (eye_r[None, None, :, :, None] * x[:, :, None, None, :]).reshape(N, Hs, Wd)

    # conv0 weight folded with the PixelShuffle permutation (block-diagonal over w):
    #   wcat[i*W*Ci + w*Ci + c, (w*r + k)*Co + co] = w0[c, co*r*r + i*r + k]
    blk = jnp.transpose(w0.astype(f32).reshape(Ci, Co, r, r), (2, 0, 3, 1))  # (i,c,k,co)
    eye_w = jnp.eye(W, dtype=f32)
    wcat = (eye_w[None, :, None, :, None, None] *
            blk[:, None, :, None, :, :]).reshape(Wd, WsCo)

    # conv0 bias in the pixel-shuffled, lane-dense layout.
    i_row = jnp.arange(Hs) % r
    k_col = jnp.arange(Ws) % r
    co = jnp.arange(Co)
    b0_full = b0.astype(f32)[(co[None, None, :] * (r * r)
                              + i_row[:, None, None] * r
                              + k_col[None, :, None])].reshape(Hs, WsCo)

    # KxK conv -> K banded (WsCo, WsCo) matrices; horizontal zero-pad is in the band.
    def banded(wj):
        pad = K // 2
        mats = []
        for ky in range(K):
            m = jnp.zeros((Ws, Co, Ws, Co), f32)
            for kx in range(K):
                band = jnp.eye(Ws, k=-(kx - pad), dtype=f32)      # [wsrc, ws]
                m = m + band[:, None, :, None] * wj[ky, kx].astype(f32)[None, :, None, :]
            mats.append(m.reshape(WsCo, WsCo))
        return jnp.stack(mats)                                    # (K, WsCo, WsCo)

    mcat = jnp.concatenate([banded(w1), banded(w2)], axis=-1)     # (K, WsCo, 2*WsCo)
    bgate = jnp.concatenate([jnp.tile(b1.astype(f32), Ws),
                             jnp.tile(b2.astype(f32), Ws)]).reshape(1, 2 * WsCo)

    # ------------- one fused pallas_call, grid over batch ------------------------
    # TODO(synk): for large images add a second grid axis over row-tiles of Hs with a
    # (TH + K - 1)-row halo so v7x's 64 MiB VMEM / 2 TensorCores stay happy; at these
    # shapes the per-step footprint is < 1 MiB.
    kernel = functools.partial(_fused_block_kernel, Hs=Hs, WsCo=WsCo, K=K)
    out_flat = pl.pallas_call(
        kernel,
        out_shape=jax.ShapeDtypeStruct((N, Hs, WsCo), f32),
        grid_spec=pltpu.PrefetchScalarGridSpec(
            num_scalar_prefetch=0,
            grid=(N,),
            in_specs=[
                pl.BlockSpec((1, Hs, Wd), lambda n: (n, 0, 0)),
                pl.BlockSpec((Wd, WsCo), lambda n: (0, 0)),          # resident
                pl.BlockSpec((Hs, WsCo), lambda n: (0, 0)),          # resident
                pl.BlockSpec((K, WsCo, 2 * WsCo), lambda n: (0, 0, 0)),  # resident
                pl.BlockSpec((1, 2 * WsCo), lambda n: (0, 0)),       # resident
            ],
            out_specs=pl.BlockSpec((1, Hs, WsCo), lambda n: (n, 0, 0)),
            scratch_shapes=[pltpu.VMEM((Hs + 2 * (K // 2), WsCo), f32)],
        ),
        compiler_params=pltpu.CompilerParams(
            dimension_semantics=("parallel",)),
    )(xd, wcat, b0_full, mcat, bgate)

    # lane-dense kernel output -> NCHW (layout plumbing, one small XLA transpose).
    out = out_flat.reshape(N, Hs, Ws, Co)
    return jnp.transpose(out, (0, 3, 1, 2))


# ----------------------------------------------------------------------------
# Deterministic parameter init (shapes consistent with the PyTorch module)
# ----------------------------------------------------------------------------
def init_params(key, in_chan, out_chan, kernel_size, upscale_factor):
    r, K = upscale_factor, kernel_size
    cmid = out_chan * r * r
    ks = jax.random.split(key, 6)
    return dict(
        w0=0.1 * jax.random.normal(ks[0], (in_chan, cmid), jnp.float32),
        b0=0.1 * jax.random.normal(ks[1], (cmid,), jnp.float32),
        w1=0.1 * jax.random.normal(ks[2], (K, K, out_chan, out_chan), jnp.float32),
        b1=0.1 * jax.random.normal(ks[3], (out_chan,), jnp.float32),
        w2=0.1 * jax.random.normal(ks[4], (K, K, out_chan, out_chan), jnp.float32),
        b2=0.1 * jax.random.normal(ks[5], (out_chan,), jnp.float32),
    )


# ----------------------------------------------------------------------------
# Pure-JAX reference (same semantics as the PyTorch forward) for validation
# ----------------------------------------------------------------------------
def reference_forward(x_nchw, params, *, upscale_factor, kernel_size):
    r, K = upscale_factor, kernel_size
    x = jnp.transpose(x_nchw, (0, 2, 3, 1)).astype(jnp.float32)
    N, H, W, Cin = x.shape
    Cmid = params["w0"].shape[1]
    Cout = Cmid // (r * r)
    y = jnp.einsum("nhwc,cd->nhwd", x, params["w0"]) + params["b0"]
    y = y.reshape(N, H, W, Cout, r, r)
    y = jnp.transpose(y, (0, 1, 4, 2, 5, 3)).reshape(N, H * r, W * r, Cout)
    y = 0.5 * y * (1.0 + jax.lax.erf(y * 0.7071067811865476))
    dn = ("NHWC", "HWIO", "NHWC")
    c1 = jax.lax.conv_general_dilated(y, params["w1"], (1, 1), "SAME",
                                      dimension_numbers=dn) + params["b1"]
    c2 = jax.lax.conv_general_dilated(y, params["w2"], (1, 1), "SAME",
                                      dimension_numbers=dn) + params["b2"]
    out = c1 * jnp.tanh(c2)
    return jnp.transpose(out, (0, 3, 1, 2))


if __name__ == "__main__":
    in_chan, out_chan, kernel_size, upscale_factor = 4, 4, 3, 2
    x = jax.random.normal(jax.random.PRNGKey(0), (2, in_chan, 16, 16), jnp.float32)
    params = init_params(jax.random.PRNGKey(1), in_chan, out_chan,
                         kernel_size, upscale_factor)

    out = basic_block_forward(x, params, upscale_factor=upscale_factor,
                              kernel_size=kernel_size)
    out = jax.block_until_ready(out)

    ref = reference_forward(x, params, upscale_factor=upscale_factor,
                            kernel_size=kernel_size)
    assert out.shape == (2, out_chan, 16 * upscale_factor, 16 * upscale_factor), out.shape
    assert jnp.allclose(out, ref, atol=1e-3, rtol=1e-2), "mismatch vs reference"

    print("KERNEL_OK")
</pallas_src>

<mosaic_0001>
module attributes {stable_mosaic.version = 11 : i64} {
  func.func @_fused_block_kernel(%arg0: i32, %arg1: memref<1x32x128xf32, #tpu.memory_space<vmem>>, %arg2: memref<128x128xf32, #tpu.memory_space<vmem>>, %arg3: memref<32x128xf32, #tpu.memory_space<vmem>>, %arg4: memref<3x128x256xf32, #tpu.memory_space<vmem>>, %arg5: memref<1x256xf32, #tpu.memory_space<vmem>>, %arg6: memref<1x32x128xf32, #tpu.memory_space<vmem>>, %arg7: memref<34x128xf32, #tpu.memory_space<vmem>>) attributes {dimension_semantics = [#tpu.dimension_semantics<parallel>], iteration_bounds = array<i64: 2>, scalar_prefetch = 0 : i64, scratch_operands = 1 : i64, tpu.core_type = #tpu.core_type<tc>, window_params = [{transform_indices = @transform_0, window_bounds = array<i64: 1, 32, 128>}, {pipeline_mode = #tpu.pipeline_mode<synchronous>, transform_indices = @transform_1, window_bounds = array<i64: 128, 128>}, {pipeline_mode = #tpu.pipeline_mode<synchronous>, transform_indices = @transform_2, window_bounds = array<i64: 32, 128>}, {pipeline_mode = #tpu.pipeline_mode<synchronous>, transform_indices = @transform_3, window_bounds = array<i64: 3, 128, 256>}, {pipeline_mode = #tpu.pipeline_mode<synchronous>, transform_indices = @transform_4, window_bounds = array<i64: 1, 256>}, {transform_indices = @transform_5, window_bounds = array<i64: 1, 32, 128>}]} {
    %c0 = arith.constant 0 : index
    %c0_0 = arith.constant 0 : index
    %c0_1 = arith.constant 0 : index
    %0 = vector.load %arg1[%c0, %c0_0, %c0_1] : memref<1x32x128xf32, #tpu.memory_space<vmem>>, vector<1x32x128xf32>
    %1 = vector.shape_cast %0 : vector<1x32x128xf32> to vector<32x128xf32>
    %c0_2 = arith.constant 0 : index
    %c0_3 = arith.constant 0 : index
    %2 = vector.load %arg2[%c0_2, %c0_3] : memref<128x128xf32, #tpu.memory_space<vmem>>, vector<128x128xf32>
    %cst = arith.constant dense<0.000000e+00> : vector<32x128xf32>
    %3 = tpu.matmul %1, %2, %cst {dimension_numbers = #tpu.dot_dimension_numbers<[1], [0], [0], [1], [0, 0, 1, 1], [], []>} : vector<32x128xf32>, vector<128x128xf32>, vector<32x128xf32> -> vector<32x128xf32>
    %c0_4 = arith.constant 0 : index
    %c0_5 = arith.constant 0 : index
    %4 = vector.load %arg3[%c0_4, %c0_5] : memref<32x128xf32, #tpu.memory_space<vmem>>, vector<32x128xf32>
    %5 = arith.addf %3, %4 : vector<32x128xf32>
    %cst_6 = arith.constant 0.707106769 : f32
    %6 = vector.broadcast %cst_6 : f32 to vector<32x128xf32>
    %7 = arith.mulf %5, %6 : vector<32x128xf32>
    %8 = math.absf %7 : vector<32x128xf32>
    %cst_7 = arith.constant 0.327591091 : f32
    %9 = vector.broadcast %cst_7 : f32 to vector<32x128xf32>
    %10 = arith.mulf %9, %8 : vector<32x128xf32>
    %cst_8 = arith.constant 1.000000e+00 : f32
    %11 = vector.broadcast %cst_8 : f32 to vector<32x128xf32>
    %12 = arith.addf %11, %10 : vector<32x128xf32>
    %cst_9 = arith.constant 1.000000e+00 : f32
    %13 = vector.broadcast %cst_9 : f32 to vector<32x128xf32>
    %14 = arith.divf %13, %12 : vector<32x128xf32>
    %cst_10 = arith.constant 1.06140542 : f32
    %15 = vector.broadcast %cst_10 : f32 to vector<32x128xf32>
    %16 = arith.mulf %14, %15 : vector<32x128xf32>
    %cst_11 = arith.constant -1.45315206 : f32
    %17 = vector.broadcast %cst_11 : f32 to vector<32x128xf32>
    %18 = arith.addf %17, %16 : vector<32x128xf32>
    %19 = arith.mulf %14, %18 : vector<32x128xf32>
    %cst_12 = arith.constant 1.42141378 : f32
    %20 = vector.broadcast %cst_12 : f32 to vector<32x128xf32>
    %21 = arith.addf %20, %19 : vector<32x128xf32>
    %22 = arith.mulf %14, %21 : vector<32x128xf32>
    %cst_13 = arith.constant -0.284496725 : f32
    %23 = vector.broadcast %cst_13 : f32 to vector<32x128xf32>
    %24 = arith.addf %23, %22 : vector<32x128xf32>
    %25 = arith.mulf %14, %24 : vector<32x128xf32>
    %cst_14 = arith.constant 0.254829586 : f32
    %26 = vector.broadcast %cst_14 : f32 to vector<32x128xf32>
    %27 = arith.addf %26, %25 : vector<32x128xf32>
    %28 = arith.mulf %14, %27 : vector<32x128xf32>
    %cst_15 = arith.constant 0.000000e+00 : f32
    %29 = vector.broadcast %cst_15 : f32 to vector<32x128xf32>
    %30 = arith.subf %29, %8 : vector<32x128xf32>
    %31 = arith.mulf %30, %8 : vector<32x128xf32>
    %32 = math.exp %31 : vector<32x128xf32>
    %33 = arith.mulf %28, %32 : vector<32x128xf32>
    %cst_16 = arith.constant 1.000000e+00 : f32
    %34 = vector.broadcast %cst_16 : f32 to vector<32x128xf32>
    %35 = arith.subf %34, %33 : vector<32x128xf32>
    %cst_17 = arith.constant 0.000000e+00 : f32
    %36 = vector.broadcast %cst_17 : f32 to vector<32x128xf32>
    %37 = arith.cmpf oge, %7, %36 : vector<32x128xf32>
    %cst_18 = arith.constant 0.000000e+00 : f32
    %38 = vector.broadcast %cst_18 : f32 to vector<32x128xf32>
    %39 = arith.subf %38, %35 : vector<32x128xf32>
    %40 = arith.select %37, %35, %39 : vector<32x128xi1>, vector<32x128xf32>
    %cst_19 = arith.constant 5.000000e-01 : f32
    %41 = vector.broadcast %cst_19 : f32 to vector<32x128xf32>
    %42 = arith.mulf %41, %5 : vector<32x128xf32>
    %cst_20 = arith.constant 1.000000e+00 : f32
    %43 = vector.broadcast %cst_20 : f32 to vector<32x128xf32>
    %44 = arith.addf %43, %40 : vector<32x128xf32>
    %45 = arith.mulf %42, %44 : vector<32x128xf32>
    %cst_21 = arith.constant 0.000000e+00 : f32
    %46 = vector.broadcast %cst_21 : f32 to vector<34x128xf32>
    %c0_22 = arith.constant 0 : index
    %c0_23 = arith.constant 0 : index
    %47 = vector.load %arg7[%c0_22, %c0_23] : memref<34x128xf32, #tpu.memory_space<vmem>>, vector<34x128xf32>
    tpu.vector_store %arg7[%c0_22, %c0_23], %46 {strides = array<i32>} : memref<34x128xf32, #tpu.memory_space<vmem>>, vector<34x128xf32>,
    %c1 = arith.constant 1 : index
    %c0_24 = arith.constant 0 : index
    %48 = vector.load %arg7[%c1, %c0_24] : memref<34x128xf32, #tpu.memory_space<vmem>>, vector<32x128xf32>
    tpu.vector_store %arg7[%c1, %c0_24], %45 {strides = array<i32>} : memref<34x128xf32, #tpu.memory_space<vmem>>, vector<32x128xf32>,
    %cst_25 = arith.constant 0.000000e+00 : f32
    %49 = vector.broadcast %cst_25 : f32 to vector<32x256xf32>
    %c0_26 = arith.constant 0 : index
    %c0_27 = arith.constant 0 : index
    %50 = vector.load %arg7[%c0_26, %c0_27] : memref<34x128xf32, #tpu.memory_space<vmem>>, vector<32x128xf32>
    %c0_28 = arith.constant 0 : index
    %c0_29 = arith.constant 0 : index
    %c0_30 = arith.constant 0 : index
    %51 = vector.load %arg4[%c0_28, %c0_29, %c0_30] : memref<3x128x256xf32, #tpu.memory_space<vmem>>, vector<1x128x256xf32>
    %52 = vector.shape_cast %51 : vector<1x128x256xf32> to vector<128x256xf32>
    %cst_31 = arith.constant dense<0.000000e+00> : vector<32x256xf32>
    %53 = tpu.matmul %50, %52, %cst_31 {dimension_numbers = #tpu.dot_dimension_numbers<[1], [0], [0], [1], [0, 0, 1, 1], [], []>} : vector<32x128xf32>, vector<128x256xf32>, vector<32x256xf32> -> vector<32x256xf32>
    %54 = arith.addf %49, %53 : vector<32x256xf32>
    %c1_32 = arith.constant 1 : index
    %c0_33 = arith.constant 0 : index
    %55 = vector.load %arg7[%c1_32, %c0_33] : memref<34x128xf32, #tpu.memory_space<vmem>>, vector<32x128xf32>
    %c1_34 = arith.constant 1 : index
    %c0_35 = arith.constant 0 : index
    %c0_36 = arith.constant 0 : index
    %56 = vector.load %arg4[%c1_34, %c0_35, %c0_36] : memref<3x128x256xf32, #tpu.memory_space<vmem>>, vector<1x128x256xf32>
    %57 = vector.shape_cast %56 : vector<1x128x256xf32> to vector<128x256xf32>
    %cst_37 = arith.constant dense<0.000000e+00> : vector<32x256xf32>
    %58 = tpu.matmul %55, %57, %cst_37 {dimension_numbers = #tpu.dot_dimension_numbers<[1], [0], [0], [1], [0, 0, 1, 1], [], []>} : vector<32x128xf32>, vector<128x256xf32>, vector<32x256xf32> -> vector<32x256xf32>
    %59 = arith.addf %54, %58 : vector<32x256xf32>
    %c2 = arith.constant 2 : index
    %c0_38 = arith.constant 0 : index
    %60 = vector.load %arg7[%c2, %c0_38] : memref<34x128xf32, #tpu.memory_space<vmem>>, vector<32x128xf32>
    %c2_39 = arith.constant 2 : index
    %c0_40 = arith.constant 0 : index
    %c0_41 = arith.constant 0 : index
    %61 = vector.load %arg4[%c2_39, %c0_40, %c0_41] : memref<3x128x256xf32, #tpu.memory_space<vmem>>, vector<1x128x256xf32>
    %62 = vector.shape_cast %61 : vector<1x128x256xf32> to vector<128x256xf32>
    %cst_42 = arith.constant dense<0.000000e+00> : vector<32x256xf32>
    %63 = tpu.matmul %60, %62, %cst_42 {dimension_numbers = #tpu.dot_dimension_numbers<[1], [0], [0], [1], [0, 0, 1, 1], [], []>} : vector<32x128xf32>, vector<128x256xf32>, vector<32x256xf32> -> vector<32x256xf32>
    %64 = arith.addf %59, %63 : vector<32x256xf32>
    %c0_43 = arith.constant 0 : index
    %c0_44 = arith.constant 0 : index
    %65 = vector.load %arg5[%c0_43, %c0_44] : memref<1x256xf32, #tpu.memory_space<vmem>>, vector<1x256xf32>
    %66 = vector.broadcast %65 : vector<1x256xf32> to vector<32x256xf32>
    %67 = arith.addf %64, %66 : vector<32x256xf32>
    %68 = vector.extract_strided_slice %67 {offsets = [0, 0], sizes = [32, 128], strides = [1, 1]} : vector<32x256xf32> to vector<32x128xf32>
    %69 = vector.extract_strided_slice %67 {offsets = [0, 128], sizes = [32, 128], strides = [1, 1]} : vector<32x256xf32> to vector<32x128xf32>
    %70 = math.tanh %69 : vector<32x128xf32>
    %71 = arith.mulf %68, %70 : vector<32x128xf32>
    %c0_45 = arith.constant 0 : index
    %c0_46 = arith.constant 0 : index
    %c0_47 = arith.constant 0 : index
    %72 = vector.load %arg6[%c0_45, %c0_46, %c0_47] : memref<1x32x128xf32, #tpu.memory_space<vmem>>, vector<1x32x128xf32>
    %73 = vector.shape_cast %72 : vector<1x32x128xf32> to vector<32x128xf32>
    %74 = vector.shape_cast %71 : vector<32x128xf32> to vector<1x32x128xf32>
    tpu.vector_store %arg6[%c0_45, %c0_46, %c0_47], %74 {strides = array<i32>} : memref<1x32x128xf32, #tpu.memory_space<vmem>>, vector<1x32x128xf32>,
    return
  }
  func.func @transform_0(%arg0: i32) -> (i32, i32, i32) {
    %c0_i32 = arith.constant 0 : i32
    %c0_i32_0 = arith.constant 0 : i32
    %c0_i32_1 = arith.constant 0 : i32
    return %arg0, %c0_i32, %c0_i32_0 : i32, i32, i32
  }
  func.func @transform_1(%arg0: i32) -> (i32, i32) {
    %c0_i32 = arith.constant 0 : i32
    %c0_i32_0 = arith.constant 0 : i32
    %c0_i32_1 = arith.constant 0 : i32
    return %c0_i32, %c0_i32_0 : i32, i32
  }
  func.func @transform_2(%arg0: i32) -> (i32, i32) {
    %c0_i32 = arith.constant 0 : i32
    %c0_i32_0 = arith.constant 0 : i32
    %c0_i32_1 = arith.constant 0 : i32
    return %c0_i32, %c0_i32_0 : i32, i32
  }
  func.func @transform_3(%arg0: i32) -> (i32, i32, i32) {
    %c0_i32 = arith.constant 0 : i32
    %c0_i32_0 = arith.constant 0 : i32
    %c0_i32_1 = arith.constant 0 : i32
    %c0_i32_2 = arith.constant 0 : i32
    return %c0_i32, %c0_i32_0, %c0_i32_1 : i32, i32, i32
  }
  func.func @transform_4(%arg0: i32) -> (i32, i32) {
    %c0_i32 = arith.constant 0 : i32
    %c0_i32_0 = arith.constant 0 : i32
    %c0_i32_1 = arith.constant 0 : i32
    return %c0_i32, %c0_i32_0 : i32, i32
  }
  func.func @transform_5(%arg0: i32) -> (i32, i32, i32) {
    %c0_i32 = arith.constant 0 : i32
    %c0_i32_0 = arith.constant 0 : i32
    %c0_i32_1 = arith.constant 0 : i32
    return %arg0, %c0_i32, %c0_i32_0 : i32, i32, i32
  }
}

</mosaic_0001>

<llo_original>
// kernel: tpu_custom_call.1
$region0: #{tpu_custom_call.1}
  #allocation0 [shape = 'u32[]', space=smem, size = 0x4, offset = 0x4, fixed_abs, tag = 'smem constant byte address 0x4 - core index']
  #allocation1 [shape = 'u32[144,128]{1,0:T(1,128)}', space=vmem, size = 0x12000, scoped, tag = 'internal scratch']
  #allocation2 [shape = 'f32[34,128]{1,0:T(8,128)}', space=vmem, size = 0x5000, scoped, tag = 'scratch operand']
  %s0 = inlined_call_operand.hbm [shape: f32[2,32,128], index: 0, kind: input, shape index: {}]
  %s1 = inlined_call_operand.hbm [shape: f32[128,128], index: 1, kind: input, shape index: {}]
  %s2 = inlined_call_operand.hbm [shape: f32[32,128], index: 2, kind: input, shape index: {}]
  %s3 = inlined_call_operand.hbm [shape: f32[3,128,256], index: 3, kind: input, shape index: {}]
  %s4 = inlined_call_operand.vmem [shape: f32[1,256], index: 4, kind: input, shape index: {}]
  %s5 = inlined_call_operand.hbm [shape: f32[2,32,128], index: 5, kind: output, shape index: {}]
  %s6 = sld [smem:[#allocation0]]
  $region69: #{tpu_custom_call.1} parent=0
    _
  %s8 = ssub.s32 1, %s6
  %s9 = scalar_select 0, %s8, %s6
  $region1: #{tpu_custom_call.1} parent=0
    #allocation3 [shape = 'u8[32768]{0}', space=vmem, size = 0x8000, scoped, tag = 'input window, operand 0']
    #allocation4 [shape = 's32[2]{0}', space=sflag, size = 0x8, scoped, tag = 'scoped memory for tpu_custom_call.1']
    #allocation5 [shape = 's32[2]{0}', space=sflag, size = 0x8, scoped, tag = 'scoped memory for tpu_custom_call.1']
    #allocation6 [shape = 'u8[65536]{0}', space=vmem, size = 0x10000, scoped, tag = 'input window, operand 1, single buffered']
    #allocation7 [shape = 's32[1]{0}', space=sflag, size = 0x4, scoped, tag = 'scoped memory for tpu_custom_call.1']
    #allocation8 [shape = 'u8[16384]{0}', space=vmem, size = 0x4000, scoped, tag = 'input window, operand 2, single buffered']
    #allocation9 [shape = 'u8[393216]{0}', space=vmem, size = 0x60000, scoped, tag = 'input window, operand 3, single buffered']
    #allocation10 [shape = 's32[1]{0}', space=sflag, size = 0x4, scoped, tag = 'scoped memory for tpu_custom_call.1']
    #allocation11 [shape = 'u8[32768]{0}', space=vmem, size = 0x8000, scoped, tag = 'output window, operand 0']
    %10 = vsyncpa [#allocation4], 0
    %s11 = scalar_lea.sflag [#allocation4], 1
    %12 = vsyncpa %s11, 0
    %13 = vsyncpa [#allocation7], 0
    %14 = vsyncpa [#allocation10], 0
    %15 = vsyncpa [#allocation5], 0
    %s16 = scalar_lea.sflag [#allocation5], 1
    %17 = vsyncpa %s16, 0
    loop: start=0, step=1, limit=4
    $region2: #{tpu_custom_call.1} parent=1 // loop_pre_header
      _
    $region3: #{tpu_custom_call.1} parent=1 // loop_header
      %s19 = sphi 0, %s23
      %p20 = scmp.ge.s32.totalorder %s19, 4
      %s29 = sphi 0, %s31
      %s32 = sphi 0, %s29
      %s33 = sphi 0, %s32
      %s49 = sphi 0, %s33
      %s53 = sphi 0, %s53
      %s55 = sphi 0, %s53
      %s56 = sphi 0, %s55
      %s70 = sphi 0, %s56
      %s74 = sphi 0, %s74
      %s76 = sphi 0, %s74
      %s77 = sphi 0, %s76
      %s91 = sphi 0, %s77
      %s95 = sphi 0, %s95
      %s97 = sphi 0, %s95
      %s98 = sphi 0, %s97
      %s112 = sphi 0, %s98
      %s116 = sphi 0, %s116
      %s118 = sphi 0, %s116
      %s119 = sphi 0, %s118
      %s133 = sphi 0, %s119
      %s139 = sphi 0, %s141
      %s142 = sphi 0, %s139
      %s143 = sphi 0, %s142
      %s159 = sphi 0, %s143
    $region4: #{tpu_custom_call.1} parent=1 // loop_header_branch
      %22 = sbr.rel (%p20) target = $region8
    $region5: #{tpu_custom_call.1} parent=1 // loop_body
      %s24 = ssub.s32 %s19, 1
      %s25 = ssub.s32 %s19, 2
      %s26 = sadd.s32 %s19, 1
      %s27 = ssub.s32 %s19, %s26
      %p28 = scmp.eq.s32.totalorder %s27, 0
      %s30 = sadd.s32 %s29, 1
      %s31 = scalar_select %p28, %s29, %s30
      %p34 = pneg %p28
      %p35 = scmp.eq.s32.totalorder %s19, 1
      %p36 = por %p34, %p35
      %p37 = scmp.ne.s32.totalorder %s29, %s32
      %p38 = scmp.eq.s32.totalorder %s19, 0
      %p39 = por %p37, %p38
      %p40 = scmp.ne.s32.totalorder %s29, %s32
      %p41 = scmp.eq.s32.totalorder %s24, 1
      %p42 = por %p40, %p41
      %p43 = scmp.ne.s32.totalorder %s32, %s33
      %p44 = scmp.eq.s32.totalorder %s24, 0
      %p45 = por %p43, %p44
      %p46 = scmp.ne.s32.totalorder %s32, %s33
      %p47 = scmp.eq.s32.totalorder %s25, 1
      %p48 = por %p46, %p47
      %p50 = scmp.ne.s32.totalorder %s33, %s49
      %p51 = scmp.eq.s32.totalorder %s25, 0
      %p52 = por %p50, %p51
      %s54 = sadd.s32 %s53, 1
      %p57 = scmp.eq.s32.totalorder %s19, 1
      %p58 = scmp.ne.s32.totalorder %s53, %s55
      %p59 = scmp.eq.s32.totalorder %s19, 0
      %p60 = por %p58, %p59
      %p61 = scmp.ne.s32.totalorder %s53, %s55
      %p62 = scmp.eq.s32.totalorder %s24, 1
      %p63 = por %p61, %p62
      %p64 = scmp.ne.s32.totalorder %s55, %s56
      %p65 = scmp.eq.s32.totalorder %s24, 0
      %p66 = por %p64, %p65
      %p67 = scmp.ne.s32.totalorder %s55, %s56
      %p68 = scmp.eq.s32.totalorder %s25, 1
      %p69 = por %p67, %p68
      %p71 = scmp.ne.s32.totalorder %s56, %s70
      %p72 = scmp.eq.s32.totalorder %s25, 0
      %p73 = por %p71, %p72
      %s75 = sadd.s32 %s74, 1
      %p78 = scmp.eq.s32.totalorder %s19, 1
      %p79 = scmp.ne.s32.totalorder %s74, %s76
      %p80 = scmp.eq.s32.totalorder %s19, 0
      %p81 = por %p79, %p80
      %p82 = scmp.ne.s32.totalorder %s74, %s76
      %p83 = scmp.eq.s32.totalorder %s24, 1
      %p84 = por %p82, %p83
      %p85 = scmp.ne.s32.totalorder %s76, %s77
      %p86 = scmp.eq.s32.totalorder %s24, 0
      %p87 = por %p85, %p86
      %p88 = scmp.ne.s32.totalorder %s76, %s77
      %p89 = scmp.eq.s32.totalorder %s25, 1
      %p90 = por %p88, %p89
      %p92 = scmp.ne.s32.totalorder %s77, %s91
      %p93 = scmp.eq.s32.totalorder %s25, 0
      %p94 = por %p92, %p93
      %s96 = sadd.s32 %s95, 1
      %p99 = scmp.eq.s32.totalorder %s19, 1
      %p100 = scmp.ne.s32.totalorder %s95, %s97
      %p101 = scmp.eq.s32.totalorder %s19, 0
      %p102 = por %p100, %p101
      %p103 = scmp.ne.s32.totalorder %s95, %s97
      %p104 = scmp.eq.s32.totalorder %s24, 1
      %p105 = por %p103, %p104
      %p106 = scmp.ne.s32.totalorder %s97, %s98
      %p107 = scmp.eq.s32.totalorder %s24, 0
      %p108 = por %p106, %p107
      %p109 = scmp.ne.s32.totalorder %s97, %s98
      %p110 = scmp.eq.s32.totalorder %s25, 1
      %p111 = por %p109, %p110
      %p113 = scmp.ne.s32.totalorder %s98, %s112
      %p114 = scmp.eq.s32.totalorder %s25, 0
      %p115 = por %p113, %p114
      %s117 = sadd.s32 %s116, 1
      %p120 = scmp.eq.s32.totalorder %s19, 1
      %p121 = scmp.ne.s32.totalorder %s116, %s118
      %p122 = scmp.eq.s32.totalorder %s19, 0
      %p123 = por %p121, %p122
      %p124 = scmp.ne.s32.totalorder %s116, %s118
      %p125 = scmp.eq.s32.totalorder %s24, 1
      %p126 = por %p124, %p125
      %p127 = scmp.ne.s32.totalorder %s118, %s119
      %p128 = scmp.eq.s32.totalorder %s24, 0
      %p129 = por %p127, %p128
      %p130 = scmp.ne.s32.totalorder %s118, %s119
      %p131 = scmp.eq.s32.totalorder %s25, 1
      %p132 = por %p130, %p131
      %p134 = scmp.ne.s32.totalorder %s119, %s133
      %p135 = scmp.eq.s32.totalorder %s25, 0
      %p136 = por %p134, %p135
      %s137 = ssub.s32 %s19, %s26
      %p138 = scmp.eq.s32.totalorder %s137, 0
      %s140 = sadd.s32 %s139, 1
      %s141 = scalar_select %p138, %s139, %s140
      %p144 = pneg %p138
      %p145 = scmp.eq.s32.totalorder %s19, 1
      %p146 = por %p144, %p145
      %p147 = scmp.ne.s32.totalorder %s139, %s142
      %p148 = scmp.eq.s32.totalorder %s19, 0
      %p149 = por %p147, %p148
      %p150 = scmp.ne.s32.totalorder %s139, %s142
      %p151 = scmp.eq.s32.totalorder %s24, 1
      %p152 = por %p150, %p151
      %p153 = scmp.ne.s32.totalorder %s142, %s143
      %p154 = scmp.eq.s32.totalorder %s24, 0
      %p155 = por %p153, %p154
      %p156 = scmp.ne.s32.totalorder %s142, %s143
      %p157 = scmp.eq.s32.totalorder %s25, 1
      %p158 = por %p156, %p157
      %p160 = scmp.ne.s32.totalorder %s143, %s159
      %p161 = scmp.eq.s32.totalorder %s25, 0
      %p162 = por %p160, %p161
      %p163 = scmp.le.s32.totalorder 1, %s19
      %p164 = scmp.lt.s32.totalorder %s19, 3
      %p165 = pnand %p163, %p164
      %p166 = pneg %p165
      // Predicated region
      $region9: #{tpu_custom_call.1} parent=5 // pred_check
        _
      $region10: #{tpu_custom_call.1} parent=5 // pred_check_branch
        %168 = sbr.rel (%p165) target = $region12
      $region11: #{tpu_custom_call.1} parent=5 // pred_region
        %s169 = ssub.s32 %s19, 1
        // Predicated region
        $region13: #{tpu_custom_call.1} parent=11 // pred_check
          %p170 = pneg %p66
        $region14: #{tpu_custom_call.1} parent=11 // pred_check_branch
          %172 = sbr.rel (%p170) target = $region16
        $region15: #{tpu_custom_call.1} parent=11 // pred_region
          %s174 = ssub.s32 2048, 2048
          %175 = vsyncadd [#allocation7], %s174
          %s176 = sshll.u32 [#allocation6], 4
          %s177 = int_to_ptr.vmem [resolvable:$true] %s176
          %182 = dma.hbm_to_vmem [thread:$0]  %s1, 2048, %s177, [#allocation7], 128, 128, 8
        $region16: #{tpu_custom_call.1} parent=11 // pred_fallthru
          _
        // Predicated region
        $region17: #{tpu_custom_call.1} parent=11 // pred_check
          %p183 = pneg %p87
        $region18: #{tpu_custom_call.1} parent=11 // pred_check_branch
          %185 = sbr.rel (%p183) target = $region20
        $region19: #{tpu_custom_call.1} parent=11 // pred_region
          %s187 = ssub.s32 512, 512
          %188 = vsyncadd [#allocation7], %s187
          %s189 = sshll.u32 [#allocation8], 4
          %s190 = int_to_ptr.vmem [resolvable:$true] %s189
          %195 = dma.hbm_to_vmem [thread:$0]  %s2, 512, %s190, [#allocation7], 128, 128, 8
        $region20: #{tpu_custom_call.1} parent=11 // pred_fallthru
          _
        // Predicated region
        $region21: #{tpu_custom_call.1} parent=11 // pred_check
          %p196 = pneg %p108
        $region22: #{tpu_custom_call.1} parent=11 // pred_check_branch
          %198 = sbr.rel (%p196) target = $region24
        $region23: #{tpu_custom_call.1} parent=11 // pred_region
          %s200 = ssub.s32 12288, 12288
          %201 = vsyncadd [#allocation10], %s200
          %s202 = sshll.u32 [#allocation9], 4
          %s203 = int_to_ptr.vmem [resolvable:$true] %s202
          %208 = dma.hbm_to_vmem [thread:$0]  %s3, 12288, %s203, [#allocation10], 256, 256, 16
        $region24: #{tpu_custom_call.1} parent=11 // pred_fallthru
          _
        // Predicated region
        $region25: #{tpu_custom_call.1} parent=11 // pred_check
          %p209 = pneg %p129
        $region26: #{tpu_custom_call.1} parent=11 // pred_check_branch
          %211 = sbr.rel (%p209) target = $region28
        $region27: #{tpu_custom_call.1} parent=11 // pred_region
          _
        $region28: #{tpu_custom_call.1} parent=11 // pred_fallthru
          _
      $region12: #{tpu_custom_call.1} parent=5 // pred_fallthru
        _
      %p212 = scmp.lt.s32.totalorder %s19, 2
      // Predicated region
      $region29: #{tpu_custom_call.1} parent=5 // pred_check
        %p213 = pneg %p212
      $region30: #{tpu_custom_call.1} parent=5 // pred_check_branch
        %215 = sbr.rel (%p213) target = $region32
      $region31: #{tpu_custom_call.1} parent=5 // pred_region
        // Predicated region
        $region33: #{tpu_custom_call.1} parent=31 // pred_check
          %p216 = pneg %p39
        $region34: #{tpu_custom_call.1} parent=31 // pred_check_branch
          %218 = sbr.rel (%p216) target = $region36
        $region35: #{tpu_custom_call.1} parent=31 // pred_region
          %s219 = sand.u32 %s29, 1
          %s220 = scalar_lea.sflag [#allocation4], %s219
          %s221 = sand.u32 %s29, 1
          %s222 = smul.addr %s221, 32
          %s223 = scalar_lea.vmem [#allocation3], %s222
          %s225 = ssub.s32 512, 512
          %226 = vsyncadd %s220, %s225
          %s227 = smul.addr %s19, 4
          %s228 = smul.addr %s227, 128
          %s229 = scalar_lea.hbm %s0, %s228
          %s230 = sshll.u32 %s223, 4
          %s231 = int_to_ptr.vmem [resolvable:$true] %s230
          %236 = dma.hbm_to_vmem [thread:$0]  %s229, 512, %s231, %s220, 128, 128, 8
        $region36: #{tpu_custom_call.1} parent=31 // pred_fallthru
          _
      $region32: #{tpu_custom_call.1} parent=5 // pred_fallthru
        _
      %p237 = scmp.le.s32.totalorder 1, %s19
      %p238 = scmp.lt.s32.totalorder %s19, 3
      %p239 = pnand %p237, %p238
      %p240 = pneg %p239
      // Predicated region
      $region37: #{tpu_custom_call.1} parent=5 // pred_check
        _
      $region38: #{tpu_custom_call.1} parent=5 // pred_check_branch
        %242 = sbr.rel (%p239) target = $region40
      $region39: #{tpu_custom_call.1} parent=5 // pred_region
        %s243 = ssub.s32 %s19, 1
        %s244 = sand.u32 %s32, 1
        %s245 = scalar_lea.sflag [#allocation4], %s244
        %s246 = sand.u32 %s32, 1
        %s247 = smul.addr %s246, 32
        %s248 = scalar_lea.vmem [#allocation3], %s247
        // Predicated region
        $region41: #{tpu_custom_call.1} parent=39 // pred_check
          %p249 = pneg %p45
        $region42: #{tpu_custom_call.1} parent=39 // pred_check_branch
          %251 = sbr.rel (%p249) target = $region44
        $region43: #{tpu_custom_call.1} parent=39 // pred_region
          %252 = dma.done %s245, 512
        $region44: #{tpu_custom_call.1} parent=39 // pred_fallthru
          _
        // Predicated region
        $region45: #{tpu_custom_call.1} parent=39 // pred_check
          %p253 = pneg %p66
        $region46: #{tpu_custom_call.1} parent=39 // pred_check_branch
          %255 = sbr.rel (%p253) target = $region48
        $region47: #{tpu_custom_call.1} parent=39 // pred_region
          %256 = dma.done [#allocation7], 2048
        $region48: #{tpu_custom_call.1} parent=39 // pred_fallthru
          _
        // Predicated region
        $region49: #{tpu_custom_call.1} parent=39 // pred_check
          %p257 = pneg %p87
        $region50: #{tpu_custom_call.1} parent=39 // pred_check_branch
          %259 = sbr.rel (%p257) target = $region52
        $region51: #{tpu_custom_call.1} parent=39 // pred_region
          %260 = dma.done [#allocation7], 512
        $region52: #{tpu_custom_call.1} parent=39 // pred_fallthru
          _
        // Predicated region
        $region53: #{tpu_custom_call.1} parent=39 // pred_check
          %p261 = pneg %p108
        $region54: #{tpu_custom_call.1} parent=39 // pred_check_branch
          %263 = sbr.rel (%p261) target = $region56
        $region55: #{tpu_custom_call.1} parent=39 // pred_region
          %264 = dma.done [#allocation10], 12288
        $region56: #{tpu_custom_call.1} parent=39 // pred_fallthru
          _
        %s265 = sand.u32 %s32, 1
        %s266 = scalar_lea.sflag [#allocation4], %s265
        %s267 = sand.u32 %s32, 1
        %s268 = smul.addr %s267, 32
        %s269 = scalar_lea.vmem [#allocation3], %s268
        %p270 = pneg %p45
        %p271 = pneg %p42
        %p272 = pneg %p66
        %p273 = pneg %p63
        %p274 = pneg %p87
        %p275 = pneg %p84
        %p276 = pneg %p108
        %p277 = pneg %p105
        %p278 = pneg %p129
        %p279 = pneg %p126
        %p280 = pneg %p155
        %p281 = pneg %p152
        %s282 = sand.u32 %s142, 1
        %s283 = scalar_lea.sflag [#allocation5], %s282
        %s284 = sand.u32 %s142, 1
        %s285 = smul.addr %s284, 32
        %s286 = scalar_lea.vmem [#allocation11], %s285
        %v287 = vld [vmem:[%s248] sm:$0xff]
        %v288 = vld [vmem:[%s248 + $0x8] sm:$0xff]
        %v289 = vld [vmem:[%s248 + $0x10] sm:$0xff]
        %v290 = vld [vmem:[%s248 + $0x18] sm:$0xff]
        %v291 = vld [vmem:[#allocation6] sm:$0xff]
        %v292 = vld [vmem:[#allocation6 + $0x8] sm:$0xff]
        %v293 = vld [vmem:[#allocation6 + $0x10] sm:$0xff]
        %v294 = vld [vmem:[#allocation6 + $0x18] sm:$0xff]
        %v295 = vld [vmem:[#allocation6 + $0x20] sm:$0xff]
        %v296 = vld [vmem:[#allocation6 + $0x28] sm:$0xff]
        %v297 = vld [vmem:[#allocation6 + $0x30] sm:$0xff]
        %v298 = vld [vmem:[#allocation6 + $0x38] sm:$0xff]
        %v299 = vld [vmem:[#allocation6 + $0x40] sm:$0xff]
        %v300 = vld [vmem:[#allocation6 + $0x48] sm:$0xff]
        %v301 = vld [vmem:[#allocation6 + $0x50] sm:$0xff]
        %v302 = vld [vmem:[#allocation6 + $0x58] sm:$0xff]
        %v303 = vld [vmem:[#allocation6 + $0x60] sm:$0xff]
        %v304 = vld [vmem:[#allocation6 + $0x68] sm:$0xff]
        %v305 = vld [vmem:[#allocation6 + $0x70] sm:$0xff]
        %v306 = vld [vmem:[#allocation6 + $0x78] sm:$0xff]
        %v307 = vld [vmem:[#allocation8] sm:$0xff]
        %v308 = vld [vmem:[#allocation8 + $0x8] sm:$0xff]
        %v309 = vld [vmem:[#allocation8 + $0x10] sm:$0xff]
        %v310 = vld [vmem:[#allocation8 + $0x18] sm:$0xff]
        %311 = vmatprep.subr.mxu0 0.0
        %312 = vmatpush1.msra.mxu0 %v291
        %313 = vmatprep.subr.mxu0 0.0
        %314 = vmatpush1.msra.mxu0 %v292
        %315 = vmatprep.subr.mxu0 0.0
        %316 = vmatpush1.msra.mxu0 %v293
        %317 = vmatprep.subr.mxu0 0.0
        %318 = vmatpush1.msra.mxu0 %v294
        %319 = vmatprep.subr.mxu0 0.0
        %320 = vmatpush1.msra.mxu0 %v295
        %321 = vmatprep.subr.mxu0 0.0
        %322 = vmatpush1.msra.mxu0 %v296
        %323 = vmatprep.subr.mxu0 0.0
        %324 = vmatpush1.msra.mxu0 %v297
        %325 = vmatprep.subr.mxu0 0.0
        %326 = vmatpush1.msra.mxu0 %v298
        %327 = vmatprep.subr.mxu0 0.0
        %328 = vmatpush1.msra.mxu0 %v299
        %329 = vmatprep.subr.mxu0 0.0
        %330 = vmatpush1.msra.mxu0 %v300
        %331 = vmatprep.subr.mxu0 0.0
        %332 = vmatpush1.msra.mxu0 %v301
        %333 = vmatprep.subr.mxu0 0.0
        %334 = vmatpush1.msra.mxu0 %v302
        %335 = vmatprep.subr.mxu0 0.0
        %336 = vmatpush1.msra.mxu0 %v303
        %337 = vmatprep.subr.mxu0 0.0
        %338 = vmatpush1.msra.mxu0 %v304
        %339 = vmatprep.subr.mxu0 0.0
        %340 = vmatpush1.msra.mxu0 %v305
        %341 = vmatprep.subr.mxu0 0.0
        %342 = vmatpush1.msra.mxu0 %v306
        %343 = vmatprep.subr.mxu0 0.0
        %344 = vmatpush1.msra.mxu0 0.0
        %345 = vmatprep.subr.mxu0 0.0
        %346 = vmatpush1.msra.mxu0 0.0
        %347 = vmatprep.subr.mxu0 0.0
        %348 = vmatpush1.msra.mxu0 0.0
        %349 = vmatprep.subr.mxu0 0.0
        %350 = vmatpush1.msra.mxu0 0.0
        %351 = vmatprep.subr.mxu0 0.0
        %352 = vmatpush1.msra.mxu0 0.0
        %353 = vmatprep.subr.mxu0 0.0
        %354 = vmatpush1.msra.mxu0 0.0
        %355 = vmatprep.subr.mxu0 0.0
        %356 = vmatpush1.msra.mxu0 0.0
        %357 = vmatprep.subr.mxu0 0.0
        %358 = vmatpush1.msra.mxu0 0.0
        %359 = vmatprep.subr.mxu0 0.0
        %360 = vmatpush1.msra.mxu0 0.0
        %361 = vmatprep.subr.mxu0 0.0
        %362 = vmatpush1.msra.mxu0 0.0
        %363 = vmatprep.subr.mxu0 0.0
        %364 = vmatpush1.msra.mxu0 0.0
        %365 = vmatprep.subr.mxu0 0.0
        %366 = vmatpush1.msra.mxu0 0.0
        %367 = vmatprep.subr.mxu0 0.0
        %368 = vmatpush1.msra.mxu0 0.0
        %369 = vmatprep.subr.mxu0 0.0
        %370 = vmatpush1.msra.mxu0 0.0
        %371 = vmatprep.subr.mxu0 0.0
        %372 = vmatpush1.msra.mxu0 0.0
        %373 = vmatprep.subr.mxu0 0.0
        %374 = vmatpush1.msra.mxu0 0.0
        %375 = vmatprep.mubr.f32.mxu0 0.0
        %376 = vmatmul.mubr.f32.gmra.mrb[0].mxu0 %v287
        %v377 = vpop.f32.mrb[0].mxu0
        %v378 = vadd.f32 %v307, %v377
        %v379 = vpop.f32.mrb[0].mxu0
        %380 = vmatprep.mubr.f32.mxu0 0.0
        %381 = vmatmul.mubr.f32.gmra.mrb[0].mxu0 %v288
        %v382 = vpop.f32.mrb[0].mxu0
        %v383 = vadd.f32 %v308, %v382
        %v384 = vpop.f32.mrb[0].mxu0
        %385 = vmatprep.mubr.f32.mxu0 0.0
        %386 = vmatmul.mubr.f32.gmra.mrb[0].mxu0 %v289
        %v387 = vpop.f32.mrb[0].mxu0
        %v388 = vadd.f32 %v309, %v387
        %v389 = vpop.f32.mrb[0].mxu0
        %390 = vmatprep.mubr.f32.mxu0 0.0
        %391 = vmatmul.mubr.f32.gmra.mrb[0].mxu0 %v290
        %v392 = vpop.f32.mrb[0].mxu0
        %v393 = vadd.f32 %v310, %v392
        %v394 = vpop.f32.mrb[0].mxu0
        %395 = vdwg.mxu0
        %v396 = vmul.f32 %v378, 0.70710677
        %v397 = vmul.f32 %v383, 0.70710677
        %v398 = vmul.f32 %v388, 0.70710677
        %v399 = vmul.f32 %v393, 0.70710677
        %v400 = vand.u32 2147483647, %v396
        %v401 = vand.u32 2147483647, %v397
        %v402 = vand.u32 2147483647, %v398
        %v403 = vand.u32 2147483647, %v399
        %v404 = vmul.f32 %v400, 0.3275911
        %v405 = vmul.f32 %v401, 0.3275911
        %v406 = vmul.f32 %v402, 0.3275911
        %v407 = vmul.f32 %v403, 0.3275911
        %v408 = vadd.f32 %v404, 1.0
        %v409 = vadd.f32 %v405, 1.0
        %v410 = vadd.f32 %v406, 1.0
        %v411 = vadd.f32 %v407, 1.0
        %v412 = vrcp.pop %v408
        %v413 = vmul.f32 1.0, %v412
        %v414 = vrcp.pop %v409
        %v415 = vmul.f32 1.0, %v414
        %v416 = vrcp.pop %v410
        %v417 = vmul.f32 1.0, %v416
        %v418 = vrcp.pop %v411
        %v419 = vmul.f32 1.0, %v418
        %v420 = vmul.f32 %v413, 1.0614054
        %v421 = vmul.f32 %v415, 1.0614054
        %v422 = vmul.f32 %v417, 1.0614054
        %v423 = vmul.f32 %v419, 1.0614054
        %v424 = vadd.f32 %v420, -1.4531521
        %v425 = vadd.f32 %v421, -1.4531521
        %v426 = vadd.f32 %v422, -1.4531521
        %v427 = vadd.f32 %v423, -1.4531521
        %v428 = vmul.f32 %v413, %v424
        %v429 = vmul.f32 %v415, %v425
        %v430 = vmul.f32 %v417, %v426
        %v431 = vmul.f32 %v419, %v427
        %v432 = vadd.f32 %v428, 1.4214138
        %v433 = vadd.f32 %v429, 1.4214138
        %v434 = vadd.f32 %v430, 1.4214138
        %v435 = vadd.f32 %v431, 1.4214138
        %v436 = vmul.f32 %v413, %v432
        %v437 = vmul.f32 %v415, %v433
        %v438 = vmul.f32 %v417, %v434
        %v439 = vmul.f32 %v419, %v435
        %v440 = vadd.f32 %v436, -0.28449672
        %v441 = vadd.f32 %v437, -0.28449672
        %v442 = vadd.f32 %v438, -0.28449672
        %v443 = vadd.f32 %v439, -0.28449672
        %v444 = vmul.f32 %v413, %v440
        %v445 = vmul.f32 %v415, %v441
        %v446 = vmul.f32 %v417, %v442
        %v447 = vmul.f32 %v419, %v443
        %v448 = vadd.f32 %v444, 0.2548296
        %v449 = vadd.f32 %v445, 0.2548296
        %v450 = vadd.f32 %v446, 0.2548296
        %v451 = vadd.f32 %v447, 0.2548296
        %v452 = vmul.f32 %v413, %v448
        %v453 = vmul.f32 %v415, %v449
        %v454 = vmul.f32 %v417, %v450
        %v455 = vmul.f32 %v419, %v451
        %v456 = vsub.f32 0.0, %v400
        %v457 = vsub.f32 0.0, %v401
        %v458 = vsub.f32 0.0, %v402
        %v459 = vsub.f32 0.0, %v403
        %v460 = vmul.f32 %v456, %v400
        %v461 = vmul.f32 %v457, %v401
        %v462 = vmul.f32 %v458, %v402
        %v463 = vmul.f32 %v459, %v403
        %v464 = vmul.f32 %v460, 1.442695
        %v465 = vpow.pop %v464
        %v466 = vmul.f32 %v461, 1.442695
        %v467 = vpow.pop %v466
        %v468 = vmul.f32 %v462, 1.442695
        %v469 = vpow.pop %v468
        %v470 = vmul.f32 %v463, 1.442695
        %v471 = vpow.pop %v470
        %v472 = vmul.f32 %v452, %v465
        %v473 = vmul.f32 %v453, %v467
        %v474 = vmul.f32 %v454, %v469
        %v475 = vmul.f32 %v455, %v471
        %v476 = vsub.f32 1.0, %v472
        %v477 = vsub.f32 1.0, %v473
        %v478 = vsub.f32 1.0, %v474
        %v479 = vsub.f32 1.0, %v475
        %vm480 = vcmp.ge.f32.partialorder %v396, 0.0
        %vm481 = vcmp.ge.f32.partialorder %v397, 0.0
        %vm482 = vcmp.ge.f32.partialorder %v398, 0.0
        %vm483 = vcmp.ge.f32.partialorder %v399, 0.0
        %v484 = vsub.f32 0.0, %v476
        %v485 = vsub.f32 0.0, %v477
        %v486 = vsub.f32 0.0, %v478
        %v487 = vsub.f32 0.0, %v479
        %v488 = vsel %vm480, %v476, %v484
        %v489 = vsel %vm481, %v477, %v485
        %v490 = vsel %vm482, %v478, %v486
        %v491 = vsel %vm483, %v479, %v487
        %v492 = vmul.f32 %v378, 0.5
        %v493 = vmul.f32 %v383, 0.5
        %v494 = vmul.f32 %v388, 0.5
        %v495 = vmul.f32 %v393, 0.5
        %v496 = vadd.f32 %v488, 1.0
        %v497 = vadd.f32 %v489, 1.0
        %v498 = vadd.f32 %v490, 1.0
        %v499 = vadd.f32 %v491, 1.0
        %v500 = vmul.f32 %v492, %v496
        %v501 = vmul.f32 %v493, %v497
        %v502 = vmul.f32 %v494, %v498
        %v503 = vmul.f32 %v495, %v499
        %504 = vst [vmem:[#allocation2] sm:$0xff] 0.0
        %505 = vst [vmem:[#allocation2 + $0x8] sm:$0xff] 0.0
        %506 = vst [vmem:[#allocation2 + $0x10] sm:$0xff] 0.0
        %507 = vst [vmem:[#allocation2 + $0x18] sm:$0xff] 0.0
        %508 = vst [vmem:[#allocation2 + $0x20] sm:$0x3] 0.0
        %509 = vst [vmem:[#allocation2 + $0x1] sm:$0xff] %v500
        %510 = vst [vmem:[#allocation2 + $0x9] sm:$0xff] %v501
        %511 = vst [vmem:[#allocation2 + $0x11] sm:$0xff] %v502
        %512 = vst [vmem:[#allocation2 + $0x19] sm:$0xff] %v503
        %v513 = vld [vmem:[#allocation2] sm:$0xff]
        %v514 = vld [vmem:[#allocation2 + $0x8] sm:$0xff]
        %v515 = vld [vmem:[#allocation2 + $0x10] sm:$0xff]
        %v516 = vld [vmem:[#allocation2 + $0x18] sm:$0xff]
        %v517 = vld [vmem:[#allocation9] sm:$0xff]
        %v518 = vld [vmem:[#allocation9 + $0x8] sm:$0xff]
        %v519 = vld [vmem:[#allocation9 + $0x10] sm:$0xff]
        %v520 = vld [vmem:[#allocation9 + $0x18] sm:$0xff]
        %v521 = vld [vmem:[#allocation9 + $0x20] sm:$0xff]
        %v522 = vld [vmem:[#allocation9 + $0x28] sm:$0xff]
        %v523 = vld [vmem:[#allocation9 + $0x30] sm:$0xff]
        %v524 = vld [vmem:[#allocation9 + $0x38] sm:$0xff]
        %v525 = vld [vmem:[#allocation9 + $0x40] sm:$0xff]
        %v526 = vld [vmem:[#allocation9 + $0x48] sm:$0xff]
        %v527 = vld [vmem:[#allocation9 + $0x50] sm:$0xff]
        %v528 = vld [vmem:[#allocation9 + $0x58] sm:$0xff]
        %v529 = vld [vmem:[#allocation9 + $0x60] sm:$0xff]
        %v530 = vld [vmem:[#allocation9 + $0x68] sm:$0xff]
        %v531 = vld [vmem:[#allocation9 + $0x70] sm:$0xff]
        %v532 = vld [vmem:[#allocation9 + $0x78] sm:$0xff]
        %v533 = vld [vmem:[#allocation9 + $0x80] sm:$0xff]
        %v534 = vld [vmem:[#allocation9 + $0x88] sm:$0xff]
        %v535 = vld [vmem:[#allocation9 + $0x90] sm:$0xff]
        %v536 = vld [vmem:[#allocation9 + $0x98] sm:$0xff]
        %v537 = vld [vmem:[#allocation9 + $0xa0] sm:$0xff]
        %v538 = vld [vmem:[#allocation9 + $0xa8] sm:$0xff]
        %v539 = vld [vmem:[#allocation9 + $0xb0] sm:$0xff]
        %v540 = vld [vmem:[#allocation9 + $0xb8] sm:$0xff]
        %v541 = vld [vmem:[#allocation9 + $0xc0] sm:$0xff]
        %v542 = vld [vmem:[#allocation9 + $0xc8] sm:$0xff]
        %v543 = vld [vmem:[#allocation9 + $0xd0] sm:$0xff]
        %v544 = vld [vmem:[#allocation9 + $0xd8] sm:$0xff]
        %v545 = vld [vmem:[#allocation9 + $0xe0] sm:$0xff]
        %v546 = vld [vmem:[#allocation9 + $0xe8] sm:$0xff]
        %v547 = vld [vmem:[#allocation9 + $0xf0] sm:$0xff]
        %v548 = vld [vmem:[#allocation9 + $0xf8] sm:$0xff]
        %v549 = vld [vmem:[#allocation2 + $0x1] sm:$0xff]
        %v550 = vld [vmem:[#allocation2 + $0x9] sm:$0xff]
        %v551 = vld [vmem:[#allocation2 + $0x11] sm:$0xff]
        %v552 = vld [vmem:[#allocation2 + $0x19] sm:$0xff]
        %s553 = scalar_lea.vmem [#allocation9], 256
        %v554 = vld [vmem:[%s553] sm:$0xff]
        %v555 = vld [vmem:[%s553 + $0x8] sm:$0xff]
        %v556 = vld [vmem:[%s553 + $0x10] sm:$0xff]
        %v557 = vld [vmem:[%s553 + $0x18] sm:$0xff]
        %v558 = vld [vmem:[%s553 + $0x20] sm:$0xff]
        %v559 = vld [vmem:[%s553 + $0x28] sm:$0xff]
        %v560 = vld [vmem:[%s553 + $0x30] sm:$0xff]
        %v561 = vld [vmem:[%s553 + $0x38] sm:$0xff]
        %v562 = vld [vmem:[%s553 + $0x40] sm:$0xff]
        %v563 = vld [vmem:[%s553 + $0x48] sm:$0xff]
        %v564 = vld [vmem:[%s553 + $0x50] sm:$0xff]
        %v565 = vld [vmem:[%s553 + $0x58] sm:$0xff]
        %v566 = vld [vmem:[%s553 + $0x60] sm:$0xff]
        %v567 = vld [vmem:[%s553 + $0x68] sm:$0xff]
        %v568 = vld [vmem:[%s553 + $0x70] sm:$0xff]
        %v569 = vld [vmem:[%s553 + $0x78] sm:$0xff]
        %v570 = vld [vmem:[%s553 + $0x80] sm:$0xff]
        %v571 = vld [vmem:[%s553 + $0x88] sm:$0xff]
        %v572 = vld [vmem:[%s553 + $0x90] sm:$0xff]
        %v573 = vld [vmem:[%s553 + $0x98] sm:$0xff]
        %v574 = vld [vmem:[%s553 + $0xa0] sm:$0xff]
        %v575 = vld [vmem:[%s553 + $0xa8] sm:$0xff]
        %v576 = vld [vmem:[%s553 + $0xb0] sm:$0xff]
        %v577 = vld [vmem:[%s553 + $0xb8] sm:$0xff]
        %v578 = vld [vmem:[%s553 + $0xc0] sm:$0xff]
        %v579 = vld [vmem:[%s553 + $0xc8] sm:$0xff]
        %v580 = vld [vmem:[%s553 + $0xd0] sm:$0xff]
        %v581 = vld [vmem:[%s553 + $0xd8] sm:$0xff]
        %v582 = vld [vmem:[%s553 + $0xe0] sm:$0xff]
        %v583 = vld [vmem:[%s553 + $0xe8] sm:$0xff]
        %v584 = vld [vmem:[%s553 + $0xf0] sm:$0xff]
        %v585 = vld [vmem:[%s553 + $0xf8] sm:$0xff]
        %586 = vmatprep.subr.mxu0 %v555
        %587 = vmatpush1.msra.mxu0 %v554
        %588 = vmatprep.subr.mxu0 %v557
        %589 = vmatpush1.msra.mxu0 %v556
        %590 = vmatprep.subr.mxu0 %v559
        %591 = vmatpush1.msra.mxu0 %v558
        %592 = vmatprep.subr.mxu0 %v561
        %593 = vmatpush1.msra.mxu0 %v560
        %594 = vmatprep.subr.mxu0 %v563
        %595 = vmatpush1.msra.mxu0 %v562
        %596 = vmatprep.subr.mxu0 %v565
        %597 = vmatpush1.msra.mxu0 %v564
        %598 = vmatprep.subr.mxu0 %v567
        %599 = vmatpush1.msra.mxu0 %v566
        %600 = vmatprep.subr.mxu0 %v569
        %601 = vmatpush1.msra.mxu0 %v568
        %602 = vmatprep.subr.mxu0 %v571
        %603 = vmatpush1.msra.mxu0 %v570
        %604 = vmatprep.subr.mxu0 %v573
        %605 = vmatpush1.msra.mxu0 %v572
        %606 = vmatprep.subr.mxu0 %v575
        %607 = vmatpush1.msra.mxu0 %v574
        %608 = vmatprep.subr.mxu0 %v577
        %609 = vmatpush1.msra.mxu0 %v576
        %610 = vmatprep.subr.mxu0 %v579
        %611 = vmatpush1.msra.mxu0 %v578
        %612 = vmatprep.subr.mxu0 %v581
        %613 = vmatpush1.msra.mxu0 %v580
        %614 = vmatprep.subr.mxu0 %v583
        %615 = vmatpush1.msra.mxu0 %v582
        %616 = vmatprep.subr.mxu0 %v585
        %617 = vmatpush1.msra.mxu0 %v584
        %618 = vmatprep.subr.mxu0 0.0
        %619 = vmatpush1.msra.mxu0 0.0
        %620 = vmatprep.subr.mxu0 0.0
        %621 = vmatpush1.msra.mxu0 0.0
        %622 = vmatprep.subr.mxu0 0.0
        %623 = vmatpush1.msra.mxu0 0.0
        %624 = vmatprep.subr.mxu0 0.0
        %625 = vmatpush1.msra.mxu0 0.0
        %626 = vmatprep.subr.mxu0 0.0
        %627 = vmatpush1.msra.mxu0 0.0
        %628 = vmatprep.subr.mxu0 0.0
        %629 = vmatpush1.msra.mxu0 0.0
        %630 = vmatprep.subr.mxu0 0.0
        %631 = vmatpush1.msra.mxu0 0.0
        %632 = vmatprep.subr.mxu0 0.0
        %633 = vmatpush1.msra.mxu0 0.0
        %634 = vmatprep.subr.mxu0 0.0
        %635 = vmatpush1.msra.mxu0 0.0
        %636 = vmatprep.subr.mxu0 0.0
        %637 = vmatpush1.msra.mxu0 0.0
        %638 = vmatprep.subr.mxu0 0.0
        %639 = vmatpush1.msra.mxu0 0.0
        %640 = vmatprep.subr.mxu0 0.0
        %641 = vmatpush1.msra.mxu0 0.0
        %642 = vmatprep.subr.mxu0 0.0
        %643 = vmatpush1.msra.mxu0 0.0
        %644 = vmatprep.subr.mxu0 0.0
        %645 = vmatpush1.msra.mxu0 0.0
        %646 = vmatprep.subr.mxu0 0.0
        %647 = vmatpush1.msra.mxu0 0.0
        %648 = vmatprep.subr.mxu0 0.0
        %649 = vmatpush1.msra.mxu0 0.0
        %650 = vmatprep.mubr.f32.mxu0 0.0
        %651 = vmatmul.mubr.f32.gmra.mrb[0].mxu0 %v549
        %v652 = vpop.f32.mrb[0].mxu0
        %v653 = vadd.f32 0.0, %v652
        %v654 = vpop.f32.mrb[0].mxu0
        %v655 = vadd.f32 0.0, %v654
        %656 = vmatprep.mubr.f32.mxu0 0.0
        %657 = vmatmul.mubr.f32.gmra.mrb[0].mxu0 %v550
        %v658 = vpop.f32.mrb[0].mxu0
        %v659 = vadd.f32 0.0, %v658
        %v660 = vpop.f32.mrb[0].mxu0
        %v661 = vadd.f32 0.0, %v660
        %662 = vmatprep.mubr.f32.mxu0 0.0
        %663 = vmatmul.mubr.f32.gmra.mrb[0].mxu0 %v551
        %v664 = vpop.f32.mrb[0].mxu0
        %v665 = vadd.f32 0.0, %v664
        %v666 = vpop.f32.mrb[0].mxu0
        %v667 = vadd.f32 0.0, %v666
        %668 = vmatprep.mubr.f32.mxu0 0.0
        %669 = vmatmul.mubr.f32.gmra.mrb[0].mxu0 %v552
        %v670 = vpop.f32.mrb[0].mxu0
        %v671 = vadd.f32 0.0, %v670
        %v672 = vpop.f32.mrb[0].mxu0
        %v673 = vadd.f32 0.0, %v672
        %674 = vdwg.mxu0
        %675 = vmatprep.subr.mxu0 %v518
        %676 = vmatpush1.msra.mxu0 %v517
        %677 = vmatprep.subr.mxu0 %v520
        %678 = vmatpush1.msra.mxu0 %v519
        %679 = vmatprep.subr.mxu0 %v522
        %680 = vmatpush1.msra.mxu0 %v521
        %681 = vmatprep.subr.mxu0 %v524
        %682 = vmatpush1.msra.mxu0 %v523
        %683 = vmatprep.subr.mxu0 %v526
        %684 = vmatpush1.msra.mxu0 %v525
        %685 = vmatprep.subr.mxu0 %v528
        %686 = vmatpush1.msra.mxu0 %v527
        %687 = vmatprep.subr.mxu0 %v530
        %688 = vmatpush1.msra.mxu0 %v529
        %689 = vmatprep.subr.mxu0 %v532
        %690 = vmatpush1.msra.mxu0 %v531
        %691 = vmatprep.subr.mxu0 %v534
        %692 = vmatpush1.msra.mxu0 %v533
        %693 = vmatprep.subr.mxu0 %v536
        %694 = vmatpush1.msra.mxu0 %v535
        %695 = vmatprep.subr.mxu0 %v538
        %696 = vmatpush1.msra.mxu0 %v537
        %697 = vmatprep.subr.mxu0 %v540
        %698 = vmatpush1.msra.mxu0 %v539
        %699 = vmatprep.subr.mxu0 %v542
        %700 = vmatpush1.msra.mxu0 %v541
        %701 = vmatprep.subr.mxu0 %v544
        %702 = vmatpush1.msra.mxu0 %v543
        %703 = vmatprep.subr.mxu0 %v546
        %704 = vmatpush1.msra.mxu0 %v545
        %705 = vmatprep.subr.mxu0 %v548
        %706 = vmatpush1.msra.mxu0 %v547
        %707 = vmatprep.subr.mxu0 0.0
        %708 = vmatpush1.msra.mxu0 0.0
        %709 = vmatprep.subr.mxu0 0.0
        %710 = vmatpush1.msra.mxu0 0.0
        %711 = vmatprep.subr.mxu0 0.0
        %712 = vmatpush1.msra.mxu0 0.0
        %713 = vmatprep.subr.mxu0 0.0
        %714 = vmatpush1.msra.mxu0 0.0
        %715 = vmatprep.subr.mxu0 0.0
        %716 = vmatpush1.msra.mxu0 0.0
        %717 = vmatprep.subr.mxu0 0.0
        %718 = vmatpush1.msra.mxu0 0.0
        %719 = vmatprep.subr.mxu0 0.0
        %720 = vmatpush1.msra.mxu0 0.0
        %721 = vmatprep.subr.mxu0 0.0
        %722 = vmatpush1.msra.mxu0 0.0
        %723 = vmatprep.subr.mxu0 0.0
        %724 = vmatpush1.msra.mxu0 0.0
        %725 = vmatprep.subr.mxu0 0.0
        %726 = vmatpush1.msra.mxu0 0.0
        %727 = vmatprep.subr.mxu0 0.0
        %728 = vmatpush1.msra.mxu0 0.0
        %729 = vmatprep.subr.mxu0 0.0
        %730 = vmatpush1.msra.mxu0 0.0
        %731 = vmatprep.subr.mxu0 0.0
        %732 = vmatpush1.msra.mxu0 0.0
        %733 = vmatprep.subr.mxu0 0.0
        %734 = vmatpush1.msra.mxu0 0.0
        %735 = vmatprep.subr.mxu0 0.0
        %736 = vmatpush1.msra.mxu0 0.0
        %737 = vmatprep.subr.mxu0 0.0
        %738 = vmatpush1.msra.mxu0 0.0
        %739 = vmatprep.mubr.f32.mxu0 0.0
        %740 = vmatmul.mubr.f32.gmra.mrb[0].mxu0 %v513
        %v741 = vpop.f32.mrb[0].mxu0
        %v742 = vadd.f32 %v653, %v741
        %v743 = vpop.f32.mrb[0].mxu0
        %v744 = vadd.f32 %v655, %v743
        %745 = vmatprep.mubr.f32.mxu0 0.0
        %746 = vmatmul.mubr.f32.gmra.mrb[0].mxu0 %v514
        %v747 = vpop.f32.mrb[0].mxu0
        %v748 = vadd.f32 %v659, %v747
        %v749 = vpop.f32.mrb[0].mxu0
        %v750 = vadd.f32 %v661, %v749
        %751 = vmatprep.mubr.f32.mxu0 0.0
        %752 = vmatmul.mubr.f32.gmra.mrb[0].mxu0 %v515
        %v753 = vpop.f32.mrb[0].mxu0
        %v754 = vadd.f32 %v665, %v753
        %v755 = vpop.f32.mrb[0].mxu0
        %v756 = vadd.f32 %v667, %v755
        %757 = vmatprep.mubr.f32.mxu0 0.0
        %758 = vmatmul.mubr.f32.gmra.mrb[0].mxu0 %v516
        %v759 = vpop.f32.mrb[0].mxu0
        %v760 = vadd.f32 %v671, %v759
        %v761 = vpop.f32.mrb[0].mxu0
        %v762 = vadd.f32 %v673, %v761
        %763 = vdwg.mxu0
        %v764 = vld [vmem:[#allocation2 + $0x2] sm:$0xff]
        %v765 = vld [vmem:[#allocation2 + $0xa] sm:$0xff]
        %v766 = vld [vmem:[#allocation2 + $0x12] sm:$0xff]
        %v767 = vld [vmem:[#allocation2 + $0x1a] sm:$0xff]
        %s768 = scalar_lea.vmem [#allocation9], 512
        %v769 = vld [vmem:[%s768] sm:$0xff]
        %v770 = vld [vmem:[%s768 + $0x8] sm:$0xff]
        %v771 = vld [vmem:[%s768 + $0x10] sm:$0xff]
        %v772 = vld [vmem:[%s768 + $0x18] sm:$0xff]
        %v773 = vld [vmem:[%s768 + $0x20] sm:$0xff]
        %v774 = vld [vmem:[%s768 + $0x28] sm:$0xff]
        %v775 = vld [vmem:[%s768 + $0x30] sm:$0xff]
        %v776 = vld [vmem:[%s768 + $0x38] sm:$0xff]
        %v777 = vld [vmem:[%s768 + $0x40] sm:$0xff]
        %v778 = vld [vmem:[%s768 + $0x48] sm:$0xff]
        %v779 = vld [vmem:[%s768 + $0x50] sm:$0xff]
        %v780 = vld [vmem:[%s768 + $0x58] sm:$0xff]
        %v781 = vld [vmem:[%s768 + $0x60] sm:$0xff]
        %v782 = vld [vmem:[%s768 + $0x68] sm:$0xff]
        %v783 = vld [vmem:[%s768 + $0x70] sm:$0xff]
        %v784 = vld [vmem:[%s768 + $0x78] sm:$0xff]
        %v785 = vld [vmem:[%s768 + $0x80] sm:$0xff]
        %v786 = vld [vmem:[%s768 + $0x88] sm:$0xff]
        %v787 = vld [vmem:[%s768 + $0x90] sm:$0xff]
        %v788 = vld [vmem:[%s768 + $0x98] sm:$0xff]
        %v789 = vld [vmem:[%s768 + $0xa0] sm:$0xff]
        %v790 = vld [vmem:[%s768 + $0xa8] sm:$0xff]
        %v791 = vld [vmem:[%s768 + $0xb0] sm:$0xff]
        %v792 = vld [vmem:[%s768 + $0xb8] sm:$0xff]
        %v793 = vld [vmem:[%s768 + $0xc0] sm:$0xff]
        %v794 = vld [vmem:[%s768 + $0xc8] sm:$0xff]
        %v795 = vld [vmem:[%s768 + $0xd0] sm:$0xff]
        %v796 = vld [vmem:[%s768 + $0xd8] sm:$0xff]
        %v797 = vld [vmem:[%s768 + $0xe0] sm:$0xff]
        %v798 = vld [vmem:[%s768 + $0xe8] sm:$0xff]
        %v799 = vld [vmem:[%s768 + $0xf0] sm:$0xff]
        %v800 = vld [vmem:[%s768 + $0xf8] sm:$0xff]
        %801 = vmatprep.subr.mxu0 %v770
        %802 = vmatpush1.msra.mxu0 %v769
        %803 = vmatprep.subr.mxu0 %v772
        %804 = vmatpush1.msra.mxu0 %v771
        %805 = vmatprep.subr.mxu0 %v774
        %806 = vmatpush1.msra.mxu0 %v773
        %807 = vmatprep.subr.mxu0 %v776
        %808 = vmatpush1.msra.mxu0 %v775
        %809 = vmatprep.subr.mxu0 %v778
        %810 = vmatpush1.msra.mxu0 %v777
        %811 = vmatprep.subr.mxu0 %v780
        %812 = vmatpush1.msra.mxu0 %v779
        %813 = vmatprep.subr.mxu0 %v782
        %814 = vmatpush1.msra.mxu0 %v781
        %815 = vmatprep.subr.mxu0 %v784
        %816 = vmatpush1.msra.mxu0 %v783
        %817 = vmatprep.subr.mxu0 %v786
        %818 = vmatpush1.msra.mxu0 %v785
        %819 = vmatprep.subr.mxu0 %v788
        %820 = vmatpush1.msra.mxu0 %v787
        %821 = vmatprep.subr.mxu0 %v790
        %822 = vmatpush1.msra.mxu0 %v789
        %823 = vmatprep.subr.mxu0 %v792
        %824 = vmatpush1.msra.mxu0 %v791
        %825 = vmatprep.subr.mxu0 %v794
        %826 = vmatpush1.msra.mxu0 %v793
        %827 = vmatprep.subr.mxu0 %v796
        %828 = vmatpush1.msra.mxu0 %v795
        %829 = vmatprep.subr.mxu0 %v798
        %830 = vmatpush1.msra.mxu0 %v797
        %831 = vmatprep.subr.mxu0 %v800
        %832 = vmatpush1.msra.mxu0 %v799
        %833 = vmatprep.subr.mxu0 0.0
        %834 = vmatpush1.msra.mxu0 0.0
        %835 = vmatprep.subr.mxu0 0.0
        %836 = vmatpush1.msra.mxu0 0.0
        %837 = vmatprep.subr.mxu0 0.0
        %838 = vmatpush1.msra.mxu0 0.0
        %839 = vmatprep.subr.mxu0 0.0
        %840 = vmatpush1.msra.mxu0 0.0
        %841 = vmatprep.subr.mxu0 0.0
        %842 = vmatpush1.msra.mxu0 0.0
        %843 = vmatprep.subr.mxu0 0.0
        %844 = vmatpush1.msra.mxu0 0.0
        %845 = vmatprep.subr.mxu0 0.0
        %846 = vmatpush1.msra.mxu0 0.0
        %847 = vmatprep.subr.mxu0 0.0
        %848 = vmatpush1.msra.mxu0 0.0
        %849 = vmatprep.subr.mxu0 0.0
        %850 = vmatpush1.msra.mxu0 0.0
        %851 = vmatprep.subr.mxu0 0.0
        %852 = vmatpush1.msra.mxu0 0.0
        %853 = vmatprep.subr.mxu0 0.0
        %854 = vmatpush1.msra.mxu0 0.0
        %855 = vmatprep.subr.mxu0 0.0
        %856 = vmatpush1.msra.mxu0 0.0
        %857 = vmatprep.subr.mxu0 0.0
        %858 = vmatpush1.msra.mxu0 0.0
        %859 = vmatprep.subr.mxu0 0.0
        %860 = vmatpush1.msra.mxu0 0.0
        %861 = vmatprep.subr.mxu0 0.0
        %862 = vmatpush1.msra.mxu0 0.0
        %863 = vmatprep.subr.mxu0 0.0
        %864 = vmatpush1.msra.mxu0 0.0
        %865 = vmatprep.mubr.f32.mxu0 0.0
        %866 = vmatmul.mubr.f32.gmra.mrb[0].mxu0 %v764
        %v867 = vpop.f32.mrb[0].mxu0
        %v868 = vadd.f32 0.0, %v867
        %v869 = vpop.f32.mrb[0].mxu0
        %v870 = vadd.f32 0.0, %v869
        %871 = vmatprep.mubr.f32.mxu0 0.0
        %872 = vmatmul.mubr.f32.gmra.mrb[0].mxu0 %v765
        %v873 = vpop.f32.mrb[0].mxu0
        %v874 = vadd.f32 0.0, %v873
        %v875 = vpop.f32.mrb[0].mxu0
        %v876 = vadd.f32 0.0, %v875
        %877 = vmatprep.mubr.f32.mxu0 0.0
        %878 = vmatmul.mubr.f32.gmra.mrb[0].mxu0 %v766
        %v879 = vpop.f32.mrb[0].mxu0
        %v880 = vadd.f32 0.0, %v879
        %v881 = vpop.f32.mrb[0].mxu0
        %v882 = vadd.f32 0.0, %v881
        %883 = vmatprep.mubr.f32.mxu0 0.0
        %884 = vmatmul.mubr.f32.gmra.mrb[0].mxu0 %v767
        %v885 = vpop.f32.mrb[0].mxu0
        %v886 = vadd.f32 0.0, %v885
        %v887 = vpop.f32.mrb[0].mxu0
        %v888 = vadd.f32 0.0, %v887
        %889 = vdwg.mxu0
        %v890 = vadd.f32 %v742, %v868
        %v891 = vadd.f32 %v744, %v870
        %v892 = vadd.f32 %v748, %v874
        %v893 = vadd.f32 %v750, %v876
        %v894 = vadd.f32 %v754, %v880
        %v895 = vadd.f32 %v756, %v882
        %v896 = vadd.f32 %v760, %v886
        %v897 = vadd.f32 %v762, %v888
        %v898 = vld [vmem:[%s4] sm:$0x3]
        %v900 = vlaneseq
        %v901 = vshrl.u32 %v900, 7
        %v902 = vsub.s32 0, %v901
        %v903 = vrot.slane %v898, %v902
        %v904 = vlaneseq
        %v905 = vshrl.u32 %v904, 7
        %v906 = vsub.s32 1, %v905
        %v907 = vrot.slane %v898, %v906
        %v910 = vadd.f32 %v890, %v903
        %v911 = vadd.f32 %v891, %v907
        %v912 = vadd.f32 %v892, %v903
        %v913 = vadd.f32 %v893, %v907
        %v914 = vadd.f32 %v894, %v903
        %v915 = vadd.f32 %v895, %v907
        %v916 = vadd.f32 %v896, %v903
        %v917 = vadd.f32 %v897, %v907
        %v918 = vtanh.pop %v911
        %v919 = vtanh.pop %v913
        %v920 = vtanh.pop %v915
        %v921 = vtanh.pop %v917
        %v922 = vmul.f32 %v910, %v918
        %v923 = vmul.f32 %v912, %v919
        %v924 = vmul.f32 %v914, %v920
        %v925 = vmul.f32 %v916, %v921
        %926 = vst [vmem:[%s286] sm:$0xff] %v922
        %927 = vst [vmem:[%s286 + $0x8] sm:$0xff] %v923
        %928 = vst [vmem:[%s286 + $0x10] sm:$0xff] %v924
        %929 = vst [vmem:[%s286 + $0x18] sm:$0xff] %v925
        %s930 = sand.u32 %s142, 1
        %s931 = scalar_lea.sflag [#allocation5], %s930
        %s932 = sand.u32 %s142, 1
        %s933 = smul.addr %s932, 32
        %s934 = scalar_lea.vmem [#allocation11], %s933
        // Predicated region
        $region57: #{tpu_custom_call.1} parent=39 // pred_check
          %p935 = pneg %p152
        $region58: #{tpu_custom_call.1} parent=39 // pred_check_branch
          %937 = sbr.rel (%p935) target = $region60
        $region59: #{tpu_custom_call.1} parent=39 // pred_region
          %s939 = ssub.s32 512, 512
          %940 = vsyncadd %s931, %s939
          %s941 = smul.addr %s24, 4
          %s942 = smul.addr %s941, 128
          %s943 = scalar_lea.hbm %s5, %s942
          %s944 = sshll.u32 %s934, 4
          %s945 = int_to_ptr.vmem [resolvable:$true] %s944
          %950 = dma.vmem_to_hbm [thread:$0]  %s945, 512, %s943, %s931, 128, 128, 8
        $region60: #{tpu_custom_call.1} parent=39 // pred_fallthru
          _
      $region40: #{tpu_custom_call.1} parent=5 // pred_fallthru
        _
      %p951 = scmp.le.s32.totalorder 2, %s19
      // Predicated region
      $region61: #{tpu_custom_call.1} parent=5 // pred_check
        %p952 = pneg %p951
      $region62: #{tpu_custom_call.1} parent=5 // pred_check_branch
        %954 = sbr.rel (%p952) target = $region64
      $region63: #{tpu_custom_call.1} parent=5 // pred_region
        %s955 = ssub.s32 %s19, 2
        // Predicated region
        $region65: #{tpu_custom_call.1} parent=63 // pred_check
          %p956 = pneg %p158
        $region66: #{tpu_custom_call.1} parent=63 // pred_check_branch
          %958 = sbr.rel (%p956) target = $region68
        $region67: #{tpu_custom_call.1} parent=63 // pred_region
          %s959 = sand.u32 %s143, 1
          %s960 = scalar_lea.sflag [#allocation5], %s959
          %s961 = sand.u32 %s143, 1
          %s962 = smul.addr %s961, 32
          %s963 = scalar_lea.vmem [#allocation11], %s962
          %964 = dma.done %s960, 512
        $region68: #{tpu_custom_call.1} parent=63 // pred_fallthru
          _
      $region64: #{tpu_custom_call.1} parent=5 // pred_fallthru
        _
    $region6: #{tpu_custom_call.1} parent=1 // loop_footer
      %s23 = sadd.s32 1, %s19
    $region7: #{tpu_custom_call.1} parent=1 // loop_footer_branch
      %18 = sbr.rel target = $region3
    $region8: #{tpu_custom_call.1} parent=1 // loop_exit
      _
    %965 = vsyncpa [#allocation4], 1
    %s966 = scalar_lea.sflag [#allocation4], 1
    %967 = vsyncpa %s966, 1
    %968 = vsyncpa [#allocation7], 1
    %969 = vsyncpa [#allocation10], 1
    %970 = vsyncpa [#allocation5], 1
    %s971 = scalar_lea.sflag [#allocation5], 1
    %972 = vsyncpa %s971, 1

</llo_original>
